<compile_context>
chip_gen: v6e
topology: v6e:2x2x1
jax: 0.10.0
libtpu: 0.0.40
codegen_flags: <defaults>
</compile_context>

<pallas_src>
import jax
import jax.numpy as jnp
from jax.experimental import pallas as pl
from jax.experimental.pallas import tpu as pltpu


def _round_up(x: int, m: int) -> int:
    return ((x + m - 1) // m) * m


def mlp_kernel(w1_ref, b1_ref, w2_ref, b2_ref, x_ref, o_ref):
    """One batch tile of  y = relu(x @ W1 + b1) @ W2 + b2.

    x_ref: [F, tile_rows, 128] f32 (batch on sublane x lane)
    o_ref: [O, tile_rows, 128] f32
    w1_ref: [H*F] f32 in SMEM, index j*F + k  == W1[k, j]
    b1_ref: [H]   f32 in SMEM
    w2_ref: [O*H] f32 in SMEM, index i*H + j  == W2[j, i]
    b2_ref: [O]   f32 in SMEM
    """
    n_feat = x_ref.shape[0]
    n_out = o_ref.shape[0]
    n_hidden = b1_ref.shape[0]

    xs = [x_ref[k, :, :] for k in range(n_feat)]          # each [tile_rows, 128]
    accs = [jnp.zeros_like(xs[0]) for _ in range(n_out)]  # f32 accumulators

    # Fully unrolled (H=10, F=2, O=2): pure VPU broadcast-FMAs, no MXU.
    for j in range(n_hidden):
        pre = xs[0] * w1_ref[j * n_feat]
        for k in range(1, n_feat):
            pre = pre + xs[k] * w1_ref[j * n_feat + k]
        h = jnp.maximum(pre + b1_ref[j], 0.0)             # bias + ReLU fused on VPU
        for i in range(n_out):
            accs[i] = accs[i] + h * w2_ref[i * n_hidden + j]

    for i in range(n_out):
        o_ref[i, :, :] = (accs[i] + b2_ref[i]).astype(o_ref.dtype)


def net_forward(x, w1, b1, w2, b2, *, tile_rows_max=1024):
    """x: [N, F] f32; w1: [F, H]; b1: [1, H]; w2: [H, O]; b2: [1, O].

    Returns [N, O] f32, numerically equal to relu(x @ w1 + b1) @ w2 + b2.
    Weights are stored [in, out] (transpose of torch.nn.Linear.weight).
    """
    n, f = x.shape
    h_dim = w1.shape[1]
    o_dim = w2.shape[1]
    out_dtype = x.dtype

    # ---- batch-on-lanes tiling ------------------------------------------
    # batch b -> (row, lane) = (b // 128, b % 128); rows padded to a multiple
    # of 8 (sublane) and split into `num_tiles` equal grid steps.
    n_rows = -(-n // 128)
    n_rows_8 = _round_up(max(n_rows, 1), 8)
    num_tiles = max(1, -(-n_rows_8 // tile_rows_max))
    if num_tiles == 1 and n_rows_8 >= 16:
        num_tiles = 2                      # give both v7x TensorCores work
    tile_rows = _round_up(-(-n_rows_8 // num_tiles), 8)
    n_rows_pad = tile_rows * num_tiles
    n_pad = n_rows_pad * 128

    # Layout plumbing (cheap, tiny arrays; zero feature padding reaches HBM).
    x_p = jnp.pad(x, ((0, n_pad - n), (0, 0))).astype(jnp.float32)   # [n_pad, F]
    x_t = x_p.T.reshape(f, n_rows_pad, 128)                          # [F, rows, 128]

    w1_flat = jnp.asarray(w1, jnp.float32).T.reshape(-1)   # [H*F], idx j*F + k
    b1_flat = jnp.asarray(b1, jnp.float32).reshape(-1)     # [H]
    w2_flat = jnp.asarray(w2, jnp.float32).T.reshape(-1)   # [O*H], idx i*H + j
    b2_flat = jnp.asarray(b2, jnp.float32).reshape(-1)     # [O]

    cost = pl.CostEstimate(
        flops=2 * n_pad * (f * h_dim + h_dim * o_dim),
        transcendentals=0,
        bytes_accessed=4 * (f * n_pad + o_dim * n_pad
                            + w1_flat.size + b1_flat.size
                            + w2_flat.size + b2_flat.size),
    )

    smem_spec = pl.BlockSpec(memory_space=pltpu.MemorySpace.SMEM)

    out_3d = pl.pallas_call(
        mlp_kernel,
        out_shape=jax.ShapeDtypeStruct((o_dim, n_rows_pad, 128), out_dtype),
        grid_spec=pltpu.PrefetchScalarGridSpec(
            num_scalar_prefetch=0,
            grid=(num_tiles,),
            in_specs=[
                smem_spec,  # W1 (flat, SMEM scalars)
                smem_spec,  # b1
                smem_spec,  # W2
                smem_spec,  # b2
                # x: blocked over batch rows, full (unpadded) feature extent.
                pl.BlockSpec((f, tile_rows, 128), lambda i: (0, i, 0)),
            ],
            out_specs=pl.BlockSpec((o_dim, tile_rows, 128), lambda i: (0, i, 0)),
        ),
        compiler_params=pltpu.CompilerParams(
            dimension_semantics=("parallel",)),
        cost_estimate=cost,
    )(w1_flat, b1_flat, w2_flat, b2_flat, x_t)

    # Undo the layout: [O, rows, 128] -> [n_pad, O] -> [:n].
    # Padded batch lanes hold relu(b1) @ W2 + b2 garbage; they are sliced off
    # here and never consumed elsewhere.
    out = out_3d.reshape(o_dim, n_pad).T
    return out[:n].astype(out_dtype)


if __name__ == "__main__":
    # Net(n_feature=2, n_hidden=10, n_output=2); x is 100 points ~N(+2,1)
    # stacked with 100 points ~N(-2,1), as in the reference script.
    n_feature, n_hidden, n_output = 2, 10, 2
    n_per_class = 100

    key = jax.random.PRNGKey(0)
    kx0, kx1, kw1, kb1, kw2, kb2 = jax.random.split(key, 6)

    x0 = 2.0 + jax.random.normal(kx0, (n_per_class, n_feature), dtype=jnp.float32)
    x1 = -2.0 + jax.random.normal(kx1, (n_per_class, n_feature), dtype=jnp.float32)
    x = jnp.concatenate([x0, x1], axis=0)                  # [200, 2]

    # PyTorch-style uniform(-1/sqrt(fan_in), +1/sqrt(fan_in)) init,
    # stored as [in, out].
    bound1 = 1.0 / jnp.sqrt(jnp.float32(n_feature))
    w1 = jax.random.uniform(kw1, (n_feature, n_hidden), jnp.float32, -bound1, bound1)
    b1 = jax.random.uniform(kb1, (1, n_hidden), jnp.float32, -bound1, bound1)
    bound2 = 1.0 / jnp.sqrt(jnp.float32(n_hidden))
    w2 = jax.random.uniform(kw2, (n_hidden, n_output), jnp.float32, -bound2, bound2)
    b2 = jax.random.uniform(kb2, (1, n_output), jnp.float32, -bound2, bound2)

    out = net_forward(x, w1, b1, w2, b2)
    jax.block_until_ready(out)

    # Pure-JAX reference check (f32, same math).
    ref = jnp.maximum(x @ w1 + b1, 0.0) @ w2 + b2
    assert out.shape == (2 * n_per_class, n_output)
    assert jnp.allclose(out, ref, atol=1e-5, rtol=1e-5)

    print("KERNEL_OK")
</pallas_src>

<mosaic_0001>
module attributes {stable_mosaic.version = 11 : i64} {
  func.func @mlp_kernel(%arg0: i32, %arg1: memref<20xf32, #tpu.memory_space<smem>>, %arg2: memref<10xf32, #tpu.memory_space<smem>>, %arg3: memref<20xf32, #tpu.memory_space<smem>>, %arg4: memref<2xf32, #tpu.memory_space<smem>>, %arg5: memref<2x8x128xf32, #tpu.memory_space<vmem>>, %arg6: memref<2x8x128xf32, #tpu.memory_space<vmem>>) attributes {dimension_semantics = [#tpu.dimension_semantics<parallel>], iteration_bounds = array<i64: 1>, scalar_prefetch = 0 : i64, scratch_operands = 0 : i64, tpu.core_type = #tpu.core_type<tc>, window_params = [{transform_indices = @transform_0, window_bounds = array<i64: 20>}, {transform_indices = @transform_1, window_bounds = array<i64: 10>}, {transform_indices = @transform_2, window_bounds = array<i64: 20>}, {transform_indices = @transform_3, window_bounds = array<i64: 2>}, {transform_indices = @transform_4, window_bounds = array<i64: 2, 8, 128>}, {transform_indices = @transform_5, window_bounds = array<i64: 2, 8, 128>}]} {
    %c0 = arith.constant 0 : index
    %c0_0 = arith.constant 0 : index
    %c0_1 = arith.constant 0 : index
    %0 = vector.load %arg5[%c0, %c0_0, %c0_1] : memref<2x8x128xf32, #tpu.memory_space<vmem>>, vector<1x8x128xf32>
    %1 = vector.shape_cast %0 : vector<1x8x128xf32> to vector<8x128xf32>
    %c1 = arith.constant 1 : index
    %c0_2 = arith.constant 0 : index
    %c0_3 = arith.constant 0 : index
    %2 = vector.load %arg5[%c1, %c0_2, %c0_3] : memref<2x8x128xf32, #tpu.memory_space<vmem>>, vector<1x8x128xf32>
    %3 = vector.shape_cast %2 : vector<1x8x128xf32> to vector<8x128xf32>
    %cst = arith.constant 0.000000e+00 : f32
    %4 = vector.broadcast %cst : f32 to vector<8x128xf32>
    %cst_4 = arith.constant 0.000000e+00 : f32
    %5 = vector.broadcast %cst_4 : f32 to vector<8x128xf32>
    %c0_5 = arith.constant 0 : index
    %6 = memref.load %arg1[%c0_5] : memref<20xf32, #tpu.memory_space<smem>>
    %7 = vector.broadcast %6 : f32 to vector<8x128xf32>
    %8 = arith.mulf %1, %7 : vector<8x128xf32>
    %c1_6 = arith.constant 1 : index
    %9 = memref.load %arg1[%c1_6] : memref<20xf32, #tpu.memory_space<smem>>
    %10 = vector.broadcast %9 : f32 to vector<8x128xf32>
    %11 = arith.mulf %3, %10 : vector<8x128xf32>
    %12 = arith.addf %8, %11 : vector<8x128xf32>
    %c0_7 = arith.constant 0 : index
    %13 = memref.load %arg2[%c0_7] : memref<10xf32, #tpu.memory_space<smem>>
    %14 = vector.broadcast %13 : f32 to vector<8x128xf32>
    %15 = arith.addf %12, %14 : vector<8x128xf32>
    %cst_8 = arith.constant 0.000000e+00 : f32
    %16 = vector.broadcast %cst_8 : f32 to vector<8x128xf32>
    %17 = arith.maximumf %15, %16 : vector<8x128xf32>
    %c0_9 = arith.constant 0 : index
    %18 = memref.load %arg3[%c0_9] : memref<20xf32, #tpu.memory_space<smem>>
    %19 = vector.broadcast %18 : f32 to vector<8x128xf32>
    %20 = arith.mulf %17, %19 : vector<8x128xf32>
    %21 = arith.addf %4, %20 : vector<8x128xf32>
    %c10 = arith.constant 10 : index
    %22 = memref.load %arg3[%c10] : memref<20xf32, #tpu.memory_space<smem>>
    %23 = vector.broadcast %22 : f32 to vector<8x128xf32>
    %24 = arith.mulf %17, %23 : vector<8x128xf32>
    %25 = arith.addf %5, %24 : vector<8x128xf32>
    %c2 = arith.constant 2 : index
    %26 = memref.load %arg1[%c2] : memref<20xf32, #tpu.memory_space<smem>>
    %27 = vector.broadcast %26 : f32 to vector<8x128xf32>
    %28 = arith.mulf %1, %27 : vector<8x128xf32>
    %c3 = arith.constant 3 : index
    %29 = memref.load %arg1[%c3] : memref<20xf32, #tpu.memory_space<smem>>
    %30 = vector.broadcast %29 : f32 to vector<8x128xf32>
    %31 = arith.mulf %3, %30 : vector<8x128xf32>
    %32 = arith.addf %28, %31 : vector<8x128xf32>
    %c1_10 = arith.constant 1 : index
    %33 = memref.load %arg2[%c1_10] : memref<10xf32, #tpu.memory_space<smem>>
    %34 = vector.broadcast %33 : f32 to vector<8x128xf32>
    %35 = arith.addf %32, %34 : vector<8x128xf32>
    %cst_11 = arith.constant 0.000000e+00 : f32
    %36 = vector.broadcast %cst_11 : f32 to vector<8x128xf32>
    %37 = arith.maximumf %35, %36 : vector<8x128xf32>
    %c1_12 = arith.constant 1 : index
    %38 = memref.load %arg3[%c1_12] : memref<20xf32, #tpu.memory_space<smem>>
    %39 = vector.broadcast %38 : f32 to vector<8x128xf32>
    %40 = arith.mulf %37, %39 : vector<8x128xf32>
    %41 = arith.addf %21, %40 : vector<8x128xf32>
    %c11 = arith.constant 11 : index
    %42 = memref.load %arg3[%c11] : memref<20xf32, #tpu.memory_space<smem>>
    %43 = vector.broadcast %42 : f32 to vector<8x128xf32>
    %44 = arith.mulf %37, %43 : vector<8x128xf32>
    %45 = arith.addf %25, %44 : vector<8x128xf32>
    %c4 = arith.constant 4 : index
    %46 = memref.load %arg1[%c4] : memref<20xf32, #tpu.memory_space<smem>>
    %47 = vector.broadcast %46 : f32 to vector<8x128xf32>
    %48 = arith.mulf %1, %47 : vector<8x128xf32>
    %c5 = arith.constant 5 : index
    %49 = memref.load %arg1[%c5] : memref<20xf32, #tpu.memory_space<smem>>
    %50 = vector.broadcast %49 : f32 to vector<8x128xf32>
    %51 = arith.mulf %3, %50 : vector<8x128xf32>
    %52 = arith.addf %48, %51 : vector<8x128xf32>
    %c2_13 = arith.constant 2 : index
    %53 = memref.load %arg2[%c2_13] : memref<10xf32, #tpu.memory_space<smem>>
    %54 = vector.broadcast %53 : f32 to vector<8x128xf32>
    %55 = arith.addf %52, %54 : vector<8x128xf32>
    %cst_14 = arith.constant 0.000000e+00 : f32
    %56 = vector.broadcast %cst_14 : f32 to vector<8x128xf32>
    %57 = arith.maximumf %55, %56 : vector<8x128xf32>
    %c2_15 = arith.constant 2 : index
    %58 = memref.load %arg3[%c2_15] : memref<20xf32, #tpu.memory_space<smem>>
    %59 = vector.broadcast %58 : f32 to vector<8x128xf32>
    %60 = arith.mulf %57, %59 : vector<8x128xf32>
    %61 = arith.addf %41, %60 : vector<8x128xf32>
    %c12 = arith.constant 12 : index
    %62 = memref.load %arg3[%c12] : memref<20xf32, #tpu.memory_space<smem>>
    %63 = vector.broadcast %62 : f32 to vector<8x128xf32>
    %64 = arith.mulf %57, %63 : vector<8x128xf32>
    %65 = arith.addf %45, %64 : vector<8x128xf32>
    %c6 = arith.constant 6 : index
    %66 = memref.load %arg1[%c6] : memref<20xf32, #tpu.memory_space<smem>>
    %67 = vector.broadcast %66 : f32 to vector<8x128xf32>
    %68 = arith.mulf %1, %67 : vector<8x128xf32>
    %c7 = arith.constant 7 : index
    %69 = memref.load %arg1[%c7] : memref<20xf32, #tpu.memory_space<smem>>
    %70 = vector.broadcast %69 : f32 to vector<8x128xf32>
    %71 = arith.mulf %3, %70 : vector<8x128xf32>
    %72 = arith.addf %68, %71 : vector<8x128xf32>
    %c3_16 = arith.constant 3 : index
    %73 = memref.load %arg2[%c3_16] : memref<10xf32, #tpu.memory_space<smem>>
    %74 = vector.broadcast %73 : f32 to vector<8x128xf32>
    %75 = arith.addf %72, %74 : vector<8x128xf32>
    %cst_17 = arith.constant 0.000000e+00 : f32
    %76 = vector.broadcast %cst_17 : f32 to vector<8x128xf32>
    %77 = arith.maximumf %75, %76 : vector<8x128xf32>
    %c3_18 = arith.constant 3 : index
    %78 = memref.load %arg3[%c3_18] : memref<20xf32, #tpu.memory_space<smem>>
    %79 = vector.broadcast %78 : f32 to vector<8x128xf32>
    %80 = arith.mulf %77, %79 : vector<8x128xf32>
    %81 = arith.addf %61, %80 : vector<8x128xf32>
    %c13 = arith.constant 13 : index
    %82 = memref.load %arg3[%c13] : memref<20xf32, #tpu.memory_space<smem>>
    %83 = vector.broadcast %82 : f32 to vector<8x128xf32>
    %84 = arith.mulf %77, %83 : vector<8x128xf32>
    %85 = arith.addf %65, %84 : vector<8x128xf32>
    %c8 = arith.constant 8 : index
    %86 = memref.load %arg1[%c8] : memref<20xf32, #tpu.memory_space<smem>>
    %87 = vector.broadcast %86 : f32 to vector<8x128xf32>
    %88 = arith.mulf %1, %87 : vector<8x128xf32>
    %c9 = arith.constant 9 : index
    %89 = memref.load %arg1[%c9] : memref<20xf32, #tpu.memory_space<smem>>
    %90 = vector.broadcast %89 : f32 to vector<8x128xf32>
    %91 = arith.mulf %3, %90 : vector<8x128xf32>
    %92 = arith.addf %88, %91 : vector<8x128xf32>
    %c4_19 = arith.constant 4 : index
    %93 = memref.load %arg2[%c4_19] : memref<10xf32, #tpu.memory_space<smem>>
    %94 = vector.broadcast %93 : f32 to vector<8x128xf32>
    %95 = arith.addf %92, %94 : vector<8x128xf32>
    %cst_20 = arith.constant 0.000000e+00 : f32
    %96 = vector.broadcast %cst_20 : f32 to vector<8x128xf32>
    %97 = arith.maximumf %95, %96 : vector<8x128xf32>
    %c4_21 = arith.constant 4 : index
    %98 = memref.load %arg3[%c4_21] : memref<20xf32, #tpu.memory_space<smem>>
    %99 = vector.broadcast %98 : f32 to vector<8x128xf32>
    %100 = arith.mulf %97, %99 : vector<8x128xf32>
    %101 = arith.addf %81, %100 : vector<8x128xf32>
    %c14 = arith.constant 14 : index
    %102 = memref.load %arg3[%c14] : memref<20xf32, #tpu.memory_space<smem>>
    %103 = vector.broadcast %102 : f32 to vector<8x128xf32>
    %104 = arith.mulf %97, %103 : vector<8x128xf32>
    %105 = arith.addf %85, %104 : vector<8x128xf32>
    %c10_22 = arith.constant 10 : index
    %106 = memref.load %arg1[%c10_22] : memref<20xf32, #tpu.memory_space<smem>>
    %107 = vector.broadcast %106 : f32 to vector<8x128xf32>
    %108 = arith.mulf %1, %107 : vector<8x128xf32>
    %c11_23 = arith.constant 11 : index
    %109 = memref.load %arg1[%c11_23] : memref<20xf32, #tpu.memory_space<smem>>
    %110 = vector.broadcast %109 : f32 to vector<8x128xf32>
    %111 = arith.mulf %3, %110 : vector<8x128xf32>
    %112 = arith.addf %108, %111 : vector<8x128xf32>
    %c5_24 = arith.constant 5 : index
    %113 = memref.load %arg2[%c5_24] : memref<10xf32, #tpu.memory_space<smem>>
    %114 = vector.broadcast %113 : f32 to vector<8x128xf32>
    %115 = arith.addf %112, %114 : vector<8x128xf32>
    %cst_25 = arith.constant 0.000000e+00 : f32
    %116 = vector.broadcast %cst_25 : f32 to vector<8x128xf32>
    %117 = arith.maximumf %115, %116 : vector<8x128xf32>
    %c5_26 = arith.constant 5 : index
    %118 = memref.load %arg3[%c5_26] : memref<20xf32, #tpu.memory_space<smem>>
    %119 = vector.broadcast %118 : f32 to vector<8x128xf32>
    %120 = arith.mulf %117, %119 : vector<8x128xf32>
    %121 = arith.addf %101, %120 : vector<8x128xf32>
    %c15 = arith.constant 15 : index
    %122 = memref.load %arg3[%c15] : memref<20xf32, #tpu.memory_space<smem>>
    %123 = vector.broadcast %122 : f32 to vector<8x128xf32>
    %124 = arith.mulf %117, %123 : vector<8x128xf32>
    %125 = arith.addf %105, %124 : vector<8x128xf32>
    %c12_27 = arith.constant 12 : index
    %126 = memref.load %arg1[%c12_27] : memref<20xf32, #tpu.memory_space<smem>>
    %127 = vector.broadcast %126 : f32 to vector<8x128xf32>
    %128 = arith.mulf %1, %127 : vector<8x128xf32>
    %c13_28 = arith.constant 13 : index
    %129 = memref.load %arg1[%c13_28] : memref<20xf32, #tpu.memory_space<smem>>
    %130 = vector.broadcast %129 : f32 to vector<8x128xf32>
    %131 = arith.mulf %3, %130 : vector<8x128xf32>
    %132 = arith.addf %128, %131 : vector<8x128xf32>
    %c6_29 = arith.constant 6 : index
    %133 = memref.load %arg2[%c6_29] : memref<10xf32, #tpu.memory_space<smem>>
    %134 = vector.broadcast %133 : f32 to vector<8x128xf32>
    %135 = arith.addf %132, %134 : vector<8x128xf32>
    %cst_30 = arith.constant 0.000000e+00 : f32
    %136 = vector.broadcast %cst_30 : f32 to vector<8x128xf32>
    %137 = arith.maximumf %135, %136 : vector<8x128xf32>
    %c6_31 = arith.constant 6 : index
    %138 = memref.load %arg3[%c6_31] : memref<20xf32, #tpu.memory_space<smem>>
    %139 = vector.broadcast %138 : f32 to vector<8x128xf32>
    %140 = arith.mulf %137, %139 : vector<8x128xf32>
    %141 = arith.addf %121, %140 : vector<8x128xf32>
    %c16 = arith.constant 16 : index
    %142 = memref.load %arg3[%c16] : memref<20xf32, #tpu.memory_space<smem>>
    %143 = vector.broadcast %142 : f32 to vector<8x128xf32>
    %144 = arith.mulf %137, %143 : vector<8x128xf32>
    %145 = arith.addf %125, %144 : vector<8x128xf32>
    %c14_32 = arith.constant 14 : index
    %146 = memref.load %arg1[%c14_32] : memref<20xf32, #tpu.memory_space<smem>>
    %147 = vector.broadcast %146 : f32 to vector<8x128xf32>
    %148 = arith.mulf %1, %147 : vector<8x128xf32>
    %c15_33 = arith.constant 15 : index
    %149 = memref.load %arg1[%c15_33] : memref<20xf32, #tpu.memory_space<smem>>
    %150 = vector.broadcast %149 : f32 to vector<8x128xf32>
    %151 = arith.mulf %3, %150 : vector<8x128xf32>
    %152 = arith.addf %148, %151 : vector<8x128xf32>
    %c7_34 = arith.constant 7 : index
    %153 = memref.load %arg2[%c7_34] : memref<10xf32, #tpu.memory_space<smem>>
    %154 = vector.broadcast %153 : f32 to vector<8x128xf32>
    %155 = arith.addf %152, %154 : vector<8x128xf32>
    %cst_35 = arith.constant 0.000000e+00 : f32
    %156 = vector.broadcast %cst_35 : f32 to vector<8x128xf32>
    %157 = arith.maximumf %155, %156 : vector<8x128xf32>
    %c7_36 = arith.constant 7 : index
    %158 = memref.load %arg3[%c7_36] : memref<20xf32, #tpu.memory_space<smem>>
    %159 = vector.broadcast %158 : f32 to vector<8x128xf32>
    %160 = arith.mulf %157, %159 : vector<8x128xf32>
    %161 = arith.addf %141, %160 : vector<8x128xf32>
    %c17 = arith.constant 17 : index
    %162 = memref.load %arg3[%c17] : memref<20xf32, #tpu.memory_space<smem>>
    %163 = vector.broadcast %162 : f32 to vector<8x128xf32>
    %164 = arith.mulf %157, %163 : vector<8x128xf32>
    %165 = arith.addf %145, %164 : vector<8x128xf32>
    %c16_37 = arith.constant 16 : index
    %166 = memref.load %arg1[%c16_37] : memref<20xf32, #tpu.memory_space<smem>>
    %167 = vector.broadcast %166 : f32 to vector<8x128xf32>
    %168 = arith.mulf %1, %167 : vector<8x128xf32>
    %c17_38 = arith.constant 17 : index
    %169 = memref.load %arg1[%c17_38] : memref<20xf32, #tpu.memory_space<smem>>
    %170 = vector.broadcast %169 : f32 to vector<8x128xf32>
    %171 = arith.mulf %3, %170 : vector<8x128xf32>
    %172 = arith.addf %168, %171 : vector<8x128xf32>
    %c8_39 = arith.constant 8 : index
    %173 = memref.load %arg2[%c8_39] : memref<10xf32, #tpu.memory_space<smem>>
    %174 = vector.broadcast %173 : f32 to vector<8x128xf32>
    %175 = arith.addf %172, %174 : vector<8x128xf32>
    %cst_40 = arith.constant 0.000000e+00 : f32
    %176 = vector.broadcast %cst_40 : f32 to vector<8x128xf32>
    %177 = arith.maximumf %175, %176 : vector<8x128xf32>
    %c8_41 = arith.constant 8 : index
    %178 = memref.load %arg3[%c8_41] : memref<20xf32, #tpu.memory_space<smem>>
    %179 = vector.broadcast %178 : f32 to vector<8x128xf32>
    %180 = arith.mulf %177, %179 : vector<8x128xf32>
    %181 = arith.addf %161, %180 : vector<8x128xf32>
    %c18 = arith.constant 18 : index
    %182 = memref.load %arg3[%c18] : memref<20xf32, #tpu.memory_space<smem>>
    %183 = vector.broadcast %182 : f32 to vector<8x128xf32>
    %184 = arith.mulf %177, %183 : vector<8x128xf32>
    %185 = arith.addf %165, %184 : vector<8x128xf32>
    %c18_42 = arith.constant 18 : index
    %186 = memref.load %arg1[%c18_42] : memref<20xf32, #tpu.memory_space<smem>>
    %187 = vector.broadcast %186 : f32 to vector<8x128xf32>
    %188 = arith.mulf %1, %187 : vector<8x128xf32>
    %c19 = arith.constant 19 : index
    %189 = memref.load %arg1[%c19] : memref<20xf32, #tpu.memory_space<smem>>
    %190 = vector.broadcast %189 : f32 to vector<8x128xf32>
    %191 = arith.mulf %3, %190 : vector<8x128xf32>
    %192 = arith.addf %188, %191 : vector<8x128xf32>
    %c9_43 = arith.constant 9 : index
    %193 = memref.load %arg2[%c9_43] : memref<10xf32, #tpu.memory_space<smem>>
    %194 = vector.broadcast %193 : f32 to vector<8x128xf32>
    %195 = arith.addf %192, %194 : vector<8x128xf32>
    %cst_44 = arith.constant 0.000000e+00 : f32
    %196 = vector.broadcast %cst_44 : f32 to vector<8x128xf32>
    %197 = arith.maximumf %195, %196 : vector<8x128xf32>
    %c9_45 = arith.constant 9 : index
    %198 = memref.load %arg3[%c9_45] : memref<20xf32, #tpu.memory_space<smem>>
    %199 = vector.broadcast %198 : f32 to vector<8x128xf32>
    %200 = arith.mulf %197, %199 : vector<8x128xf32>
    %201 = arith.addf %181, %200 : vector<8x128xf32>
    %c19_46 = arith.constant 19 : index
    %202 = memref.load %arg3[%c19_46] : memref<20xf32, #tpu.memory_space<smem>>
    %203 = vector.broadcast %202 : f32 to vector<8x128xf32>
    %204 = arith.mulf %197, %203 : vector<8x128xf32>
    %205 = arith.addf %185, %204 : vector<8x128xf32>
    %c0_47 = arith.constant 0 : index
    %206 = memref.load %arg4[%c0_47] : memref<2xf32, #tpu.memory_space<smem>>
    %207 = vector.broadcast %206 : f32 to vector<8x128xf32>
    %208 = arith.addf %201, %207 : vector<8x128xf32>
    %c0_48 = arith.constant 0 : index
    %c0_49 = arith.constant 0 : index
    %c0_50 = arith.constant 0 : index
    %209 = vector.load %arg6[%c0_48, %c0_49, %c0_50] : memref<2x8x128xf32, #tpu.memory_space<vmem>>, vector<1x8x128xf32>
    %210 = vector.shape_cast %209 : vector<1x8x128xf32> to vector<8x128xf32>
    %211 = vector.shape_cast %208 : vector<8x128xf32> to vector<1x8x128xf32>
    tpu.vector_store %arg6[%c0_48, %c0_49, %c0_50], %211 {strides = array<i32>} : memref<2x8x128xf32, #tpu.memory_space<vmem>>, vector<1x8x128xf32>,
    %c1_51 = arith.constant 1 : index
    %212 = memref.load %arg4[%c1_51] : memref<2xf32, #tpu.memory_space<smem>>
    %213 = vector.broadcast %212 : f32 to vector<8x128xf32>
    %214 = arith.addf %205, %213 : vector<8x128xf32>
    %c1_52 = arith.constant 1 : index
    %c0_53 = arith.constant 0 : index
    %c0_54 = arith.constant 0 : index
    %215 = vector.load %arg6[%c1_52, %c0_53, %c0_54] : memref<2x8x128xf32, #tpu.memory_space<vmem>>, vector<1x8x128xf32>
    %216 = vector.shape_cast %215 : vector<1x8x128xf32> to vector<8x128xf32>
    %217 = vector.shape_cast %214 : vector<8x128xf32> to vector<1x8x128xf32>
    tpu.vector_store %arg6[%c1_52, %c0_53, %c0_54], %217 {strides = array<i32>} : memref<2x8x128xf32, #tpu.memory_space<vmem>>, vector<1x8x128xf32>,
    return
  }
  func.func @transform_0(%arg0: i32) -> i32 {
    %c0_i32 = arith.constant 0 : i32
    %c0_i32_0 = arith.constant 0 : i32
    return %c0_i32 : i32
  }
  func.func @transform_1(%arg0: i32) -> i32 {
    %c0_i32 = arith.constant 0 : i32
    %c0_i32_0 = arith.constant 0 : i32
    return %c0_i32 : i32
  }
  func.func @transform_2(%arg0: i32) -> i32 {
    %c0_i32 = arith.constant 0 : i32
    %c0_i32_0 = arith.constant 0 : i32
    return %c0_i32 : i32
  }
  func.func @transform_3(%arg0: i32) -> i32 {
    %c0_i32 = arith.constant 0 : i32
    %c0_i32_0 = arith.constant 0 : i32
    return %c0_i32 : i32
  }
  func.func @transform_4(%arg0: i32) -> (i32, i32, i32) {
    %c0_i32 = arith.constant 0 : i32
    %c0_i32_0 = arith.constant 0 : i32
    %c0_i32_1 = arith.constant 0 : i32
    return %c0_i32, %arg0, %c0_i32_0 : i32, i32, i32
  }
  func.func @transform_5(%arg0: i32) -> (i32, i32, i32) {
    %c0_i32 = arith.constant 0 : i32
    %c0_i32_0 = arith.constant 0 : i32
    %c0_i32_1 = arith.constant 0 : i32
    return %c0_i32, %arg0, %c0_i32_0 : i32, i32, i32
  }
}

</mosaic_0001>

<llo_original>
// kernel: tpu_custom_call.1
$region0: #{tpu_custom_call.1}
  #allocation0 [shape = 'u32[]', space=smem, size = 0x4, offset = 0x4, fixed_abs, tag = 'smem constant byte address 0x4 - core index']
  #allocation1 [shape = 'u32[144,128]{1,0:T(1,128)}', space=vmem, size = 0x12000, scoped, tag = 'internal scratch']
  %s0 = inlined_call_operand.hbm [shape: f32[20], index: 0, kind: input, shape index: {}]
  %s1 = inlined_call_operand.vmem [shape: f32[10], index: 1, kind: input, shape index: {}]
  %s2 = inlined_call_operand.vmem [shape: f32[20], index: 2, kind: input, shape index: {}]
  %s3 = inlined_call_operand.vmem [shape: f32[2], index: 3, kind: input, shape index: {}]
  %s4 = inlined_call_operand.hbm [shape: f32[2,8,128], index: 4, kind: input, shape index: {}]
  %s5 = inlined_call_operand.hbm [shape: f32[2,8,128], index: 5, kind: output, shape index: {}]
  %s6 = sld [smem:[#allocation0]]
  $region50: #{tpu_custom_call.1} parent=0
    _
  %s8 = ssub.s32 1, %s6
  %s9 = scalar_select 0, %s8, %s6
  $region1: #{tpu_custom_call.1} parent=0
    #allocation2 [shape = 'u8[512]{0}', space=smem, size = 0x200, scoped, tag = 'input window, operand 0, single buffered']
    #allocation3 [shape = 's32[1]{0}', space=sflag, size = 0x4, scoped, tag = 'scoped memory for tpu_custom_call.1']
    #allocation4 [shape = 's32[1]{0}', space=sflag, size = 0x4, scoped, tag = 'scoped memory for tpu_custom_call.1']
    #allocation5 [shape = 's32[1]{0}', space=sflag, size = 0x4, scoped, tag = 'scoped memory for tpu_custom_call.1']
    #allocation6 [shape = 's32[1]{0}', space=sflag, size = 0x4, scoped, tag = 'scoped memory for tpu_custom_call.1']
    #allocation7 [shape = 'u8[512]{0}', space=smem, size = 0x200, scoped, tag = 'input window, operand 1, single buffered']
    #allocation8 [shape = 'u8[512]{0}', space=smem, size = 0x200, scoped, tag = 'input window, operand 2, single buffered']
    #allocation9 [shape = 's32[1]{0}', space=sflag, size = 0x4, scoped, tag = 'scoped memory for tpu_custom_call.1']
    #allocation10 [shape = 'u8[512]{0}', space=smem, size = 0x200, scoped, tag = 'input window, operand 3, single buffered']
    #allocation11 [shape = 'u8[8192]{0}', space=vmem, size = 0x2000, scoped, tag = 'input window, operand 4, single buffered']
    #allocation12 [shape = 'u8[8192]{0}', space=vmem, size = 0x2000, scoped, tag = 'output window, operand 0, single buffered']
    %10 = vsyncpa [#allocation5], 0
    %11 = vsyncpa [#allocation6], 0
    %12 = vsyncpa [#allocation9], 0
    %13 = vsyncpa [#allocation3], 0
    %14 = vsyncpa [#allocation4], 0
    // Predicated region
    $region2: #{tpu_custom_call.1} parent=1 // pred_check
      _
    $region3: #{tpu_custom_call.1} parent=1 // pred_check_branch
      %16 = sbr.rel (0) target = $region5
    $region4: #{tpu_custom_call.1} parent=1 // pred_region
      %s18 = ssub.s32 16, 16
      %19 = vsyncadd [#allocation5], %s18
      %22 = dma.hbm_to_smem %s0, 16, [#allocation2], [#allocation5]
    $region5: #{tpu_custom_call.1} parent=1 // pred_fallthru
      _
    // Predicated region
    $region6: #{tpu_custom_call.1} parent=1 // pred_check
      _
    $region7: #{tpu_custom_call.1} parent=1 // pred_check_branch
      %24 = sbr.rel (0) target = $region9
    $region8: #{tpu_custom_call.1} parent=1 // pred_region
      %s26 = ssub.s32 16, 16
      %27 = vsyncadd [#allocation6], %s26
      %s29 = sshll.u32 %s1, 4
      %s30 = int_to_ptr.vmem [resolvable:$true] %s29
      %32 = dma.vmem_to_smem %s30, 16, [#allocation7], [#allocation6]
    $region9: #{tpu_custom_call.1} parent=1 // pred_fallthru
      _
    // Predicated region
    $region10: #{tpu_custom_call.1} parent=1 // pred_check
      _
    $region11: #{tpu_custom_call.1} parent=1 // pred_check_branch
      %34 = sbr.rel (0) target = $region13
    $region12: #{tpu_custom_call.1} parent=1 // pred_region
      %s36 = ssub.s32 16, 16
      %37 = vsyncadd [#allocation9], %s36
      %s39 = sshll.u32 %s2, 4
      %s40 = int_to_ptr.vmem [resolvable:$true] %s39
      %42 = dma.vmem_to_smem %s40, 16, [#allocation8], [#allocation9]
    $region13: #{tpu_custom_call.1} parent=1 // pred_fallthru
      _
    // Predicated region
    $region14: #{tpu_custom_call.1} parent=1 // pred_check
      _
    $region15: #{tpu_custom_call.1} parent=1 // pred_check_branch
      %44 = sbr.rel (0) target = $region17
    $region16: #{tpu_custom_call.1} parent=1 // pred_region
      %s46 = ssub.s32 16, 16
      %47 = vsyncadd [#allocation9], %s46
      %s49 = sshll.u32 %s3, 4
      %s50 = int_to_ptr.vmem [resolvable:$true] %s49
      %52 = dma.vmem_to_smem %s50, 16, [#allocation10], [#allocation9]
    $region17: #{tpu_custom_call.1} parent=1 // pred_fallthru
      _
    // Predicated region
    $region18: #{tpu_custom_call.1} parent=1 // pred_check
      _
    $region19: #{tpu_custom_call.1} parent=1 // pred_check_branch
      %54 = sbr.rel (0) target = $region21
    $region20: #{tpu_custom_call.1} parent=1 // pred_region
      %s56 = ssub.s32 256, 256
      %57 = vsyncadd [#allocation3], %s56
      %s58 = sshll.u32 [#allocation11], 4
      %s59 = int_to_ptr.vmem [resolvable:$true] %s58
      %64 = dma.hbm_to_vmem [thread:$0]  %s4, 256, %s59, [#allocation3], 128, 128, 8
    $region21: #{tpu_custom_call.1} parent=1 // pred_fallthru
      _
    // Predicated region
    $region22: #{tpu_custom_call.1} parent=1 // pred_check
      _
    $region23: #{tpu_custom_call.1} parent=1 // pred_check_branch
      %66 = sbr.rel (0) target = $region25
    $region24: #{tpu_custom_call.1} parent=1 // pred_region
      %67 = dma.done [#allocation5], 16
    $region25: #{tpu_custom_call.1} parent=1 // pred_fallthru
      _
    // Predicated region
    $region26: #{tpu_custom_call.1} parent=1 // pred_check
      _
    $region27: #{tpu_custom_call.1} parent=1 // pred_check_branch
      %69 = sbr.rel (0) target = $region29
    $region28: #{tpu_custom_call.1} parent=1 // pred_region
      %70 = dma.done [#allocation6], 16
    $region29: #{tpu_custom_call.1} parent=1 // pred_fallthru
      _
    // Predicated region
    $region30: #{tpu_custom_call.1} parent=1 // pred_check
      _
    $region31: #{tpu_custom_call.1} parent=1 // pred_check_branch
      %72 = sbr.rel (0) target = $region33
    $region32: #{tpu_custom_call.1} parent=1 // pred_region
      %73 = dma.done [#allocation9], 16
    $region33: #{tpu_custom_call.1} parent=1 // pred_fallthru
      _
    // Predicated region
    $region34: #{tpu_custom_call.1} parent=1 // pred_check
      _
    $region35: #{tpu_custom_call.1} parent=1 // pred_check_branch
      %75 = sbr.rel (0) target = $region37
    $region36: #{tpu_custom_call.1} parent=1 // pred_region
      %76 = dma.done [#allocation9], 16
    $region37: #{tpu_custom_call.1} parent=1 // pred_fallthru
      _
    // Predicated region
    $region38: #{tpu_custom_call.1} parent=1 // pred_check
      _
    $region39: #{tpu_custom_call.1} parent=1 // pred_check_branch
      %78 = sbr.rel (0) target = $region41
    $region40: #{tpu_custom_call.1} parent=1 // pred_region
      %79 = dma.done [#allocation3], 256
    $region41: #{tpu_custom_call.1} parent=1 // pred_fallthru
      _
    %80 = sfence
    %v81 = vld [vmem:[#allocation11] sm:$0xff]
    %s82 = scalar_lea.vmem [#allocation11], 8
    %v83 = vld [vmem:[%s82] sm:$0xff]
    %s84 = sld [smem:[#allocation2]]
    %v85 = vstv %s84
    %v86 = vmul.f32 %v81, %v85
    %s87 = sld [smem:[#allocation2 + $0x1]]
    %v88 = vstv %s87
    %v89 = vmul.f32 %v83, %v88
    %v90 = vadd.f32 %v86, %v89
    %s91 = sld [smem:[#allocation7]]
    %v92 = vstv %s91
    %v93 = vadd.f32 %v90, %v92
    %v94 = vmax.f32 %v93, 0.0
    %s95 = sld [smem:[#allocation8]]
    %v96 = vstv %s95
    %v97 = vmul.f32 %v94, %v96
    %v98 = vadd.f32 %v97, 0.0
    %s99 = sld [smem:[#allocation8 + $0xa]]
    %v100 = vstv %s99
    %v101 = vmul.f32 %v94, %v100
    %v102 = vadd.f32 %v101, 0.0
    %s103 = sld [smem:[#allocation2 + $0x2]]
    %v104 = vstv %s103
    %v105 = vmul.f32 %v81, %v104
    %s106 = sld [smem:[#allocation2 + $0x3]]
    %v107 = vstv %s106
    %v108 = vmul.f32 %v83, %v107
    %v109 = vadd.f32 %v105, %v108
    %s110 = sld [smem:[#allocation7 + $0x1]]
    %v111 = vstv %s110
    %v112 = vadd.f32 %v109, %v111
    %v113 = vmax.f32 %v112, 0.0
    %s114 = sld [smem:[#allocation8 + $0x1]]
    %v115 = vstv %s114
    %v116 = vmul.f32 %v113, %v115
    %v117 = vadd.f32 %v98, %v116
    %s118 = sld [smem:[#allocation8 + $0xb]]
    %v119 = vstv %s118
    %v120 = vmul.f32 %v113, %v119
    %v121 = vadd.f32 %v102, %v120
    %s122 = sld [smem:[#allocation2 + $0x4]]
    %v123 = vstv %s122
    %v124 = vmul.f32 %v81, %v123
    %s125 = sld [smem:[#allocation2 + $0x5]]
    %v126 = vstv %s125
    %v127 = vmul.f32 %v83, %v126
    %v128 = vadd.f32 %v124, %v127
    %s129 = sld [smem:[#allocation7 + $0x2]]
    %v130 = vstv %s129
    %v131 = vadd.f32 %v128, %v130
    %v132 = vmax.f32 %v131, 0.0
    %s133 = sld [smem:[#allocation8 + $0x2]]
    %v134 = vstv %s133
    %v135 = vmul.f32 %v132, %v134
    %v136 = vadd.f32 %v117, %v135
    %s137 = sld [smem:[#allocation8 + $0xc]]
    %v138 = vstv %s137
    %v139 = vmul.f32 %v132, %v138
    %v140 = vadd.f32 %v121, %v139
    %s141 = sld [smem:[#allocation2 + $0x6]]
    %v142 = vstv %s141
    %v143 = vmul.f32 %v81, %v142
    %s144 = sld [smem:[#allocation2 + $0x7]]
    %v145 = vstv %s144
    %v146 = vmul.f32 %v83, %v145
    %v147 = vadd.f32 %v143, %v146
    %s148 = sld [smem:[#allocation7 + $0x3]]
    %v149 = vstv %s148
    %v150 = vadd.f32 %v147, %v149
    %v151 = vmax.f32 %v150, 0.0
    %s152 = sld [smem:[#allocation8 + $0x3]]
    %v153 = vstv %s152
    %v154 = vmul.f32 %v151, %v153
    %v155 = vadd.f32 %v136, %v154
    %s156 = sld [smem:[#allocation8 + $0xd]]
    %v157 = vstv %s156
    %v158 = vmul.f32 %v151, %v157
    %v159 = vadd.f32 %v140, %v158
    %s160 = sld [smem:[#allocation2 + $0x8]]
    %v161 = vstv %s160
    %v162 = vmul.f32 %v81, %v161
    %s163 = sld [smem:[#allocation2 + $0x9]]
    %v164 = vstv %s163
    %v165 = vmul.f32 %v83, %v164
    %v166 = vadd.f32 %v162, %v165
    %s167 = sld [smem:[#allocation7 + $0x4]]
    %v168 = vstv %s167
    %v169 = vadd.f32 %v166, %v168
    %v170 = vmax.f32 %v169, 0.0
    %s171 = sld [smem:[#allocation8 + $0x4]]
    %v172 = vstv %s171
    %v173 = vmul.f32 %v170, %v172
    %v174 = vadd.f32 %v155, %v173
    %s175 = sld [smem:[#allocation8 + $0xe]]
    %v176 = vstv %s175
    %v177 = vmul.f32 %v170, %v176
    %v178 = vadd.f32 %v159, %v177
    %s179 = sld [smem:[#allocation2 + $0xa]]
    %v180 = vstv %s179
    %v181 = vmul.f32 %v81, %v180
    %s182 = sld [smem:[#allocation2 + $0xb]]
    %v183 = vstv %s182
    %v184 = vmul.f32 %v83, %v183
    %v185 = vadd.f32 %v181, %v184
    %s186 = sld [smem:[#allocation7 + $0x5]]
    %v187 = vstv %s186
    %v188 = vadd.f32 %v185, %v187
    %v189 = vmax.f32 %v188, 0.0
    %s190 = sld [smem:[#allocation8 + $0x5]]
    %v191 = vstv %s190
    %v192 = vmul.f32 %v189, %v191
    %v193 = vadd.f32 %v174, %v192
    %s194 = sld [smem:[#allocation8 + $0xf]]
    %v195 = vstv %s194
    %v196 = vmul.f32 %v189, %v195
    %v197 = vadd.f32 %v178, %v196
    %s198 = sld [smem:[#allocation2 + $0xc]]
    %v199 = vstv %s198
    %v200 = vmul.f32 %v81, %v199
    %s201 = sld [smem:[#allocation2 + $0xd]]
    %v202 = vstv %s201
    %v203 = vmul.f32 %v83, %v202
    %v204 = vadd.f32 %v200, %v203
    %s205 = sld [smem:[#allocation7 + $0x6]]
    %v206 = vstv %s205
    %v207 = vadd.f32 %v204, %v206
    %v208 = vmax.f32 %v207, 0.0
    %s209 = sld [smem:[#allocation8 + $0x6]]
    %v210 = vstv %s209
    %v211 = vmul.f32 %v208, %v210
    %v212 = vadd.f32 %v193, %v211
    %s213 = sld [smem:[#allocation8 + $0x10]]
    %v214 = vstv %s213
    %v215 = vmul.f32 %v208, %v214
    %v216 = vadd.f32 %v197, %v215
    %s217 = sld [smem:[#allocation2 + $0xe]]
    %v218 = vstv %s217
    %v219 = vmul.f32 %v81, %v218
    %s220 = sld [smem:[#allocation2 + $0xf]]
    %v221 = vstv %s220
    %v222 = vmul.f32 %v83, %v221
    %v223 = vadd.f32 %v219, %v222
    %s224 = sld [smem:[#allocation7 + $0x7]]
    %v225 = vstv %s224
    %v226 = vadd.f32 %v223, %v225
    %v227 = vmax.f32 %v226, 0.0
    %s228 = sld [smem:[#allocation8 + $0x7]]
    %v229 = vstv %s228
    %v230 = vmul.f32 %v227, %v229
    %v231 = vadd.f32 %v212, %v230
    %s232 = sld [smem:[#allocation8 + $0x11]]
    %v233 = vstv %s232
    %v234 = vmul.f32 %v227, %v233
    %v235 = vadd.f32 %v216, %v234
    %s236 = sld [smem:[#allocation2 + $0x10]]
    %v237 = vstv %s236
    %v238 = vmul.f32 %v81, %v237
    %s239 = sld [smem:[#allocation2 + $0x11]]
    %v240 = vstv %s239
    %v241 = vmul.f32 %v83, %v240
    %v242 = vadd.f32 %v238, %v241
    %s243 = sld [smem:[#allocation7 + $0x8]]
    %v244 = vstv %s243
    %v245 = vadd.f32 %v242, %v244
    %v246 = vmax.f32 %v245, 0.0
    %s247 = sld [smem:[#allocation8 + $0x8]]
    %v248 = vstv %s247
    %v249 = vmul.f32 %v246, %v248
    %v250 = vadd.f32 %v231, %v249
    %s251 = sld [smem:[#allocation8 + $0x12]]
    %v252 = vstv %s251
    %v253 = vmul.f32 %v246, %v252
    %v254 = vadd.f32 %v235, %v253
    %s255 = sld [smem:[#allocation2 + $0x12]]
    %v256 = vstv %s255
    %v257 = vmul.f32 %v81, %v256
    %s258 = sld [smem:[#allocation2 + $0x13]]
    %v259 = vstv %s258
    %v260 = vmul.f32 %v83, %v259
    %v261 = vadd.f32 %v257, %v260
    %s262 = sld [smem:[#allocation7 + $0x9]]
    %v263 = vstv %s262
    %v264 = vadd.f32 %v261, %v263
    %v265 = vmax.f32 %v264, 0.0
    %s266 = sld [smem:[#allocation8 + $0x9]]
    %v267 = vstv %s266
    %v268 = vmul.f32 %v265, %v267
    %v269 = vadd.f32 %v250, %v268
    %s270 = sld [smem:[#allocation8 + $0x13]]
    %v271 = vstv %s270
    %v272 = vmul.f32 %v265, %v271
    %v273 = vadd.f32 %v254, %v272
    %s274 = sld [smem:[#allocation10]]
    %v275 = vstv %s274
    %v276 = vadd.f32 %v269, %v275
    %277 = vst [vmem:[#allocation12] sm:$0xff] %v276
    %s278 = sld [smem:[#allocation10 + $0x1]]
    %v279 = vstv %s278
    %v280 = vadd.f32 %v273, %v279
    %s281 = scalar_lea.vmem [#allocation12], 8
    %282 = vst [vmem:[%s281] sm:$0xff] %v280
    // Predicated region
    $region42: #{tpu_custom_call.1} parent=1 // pred_check
      _
    $region43: #{tpu_custom_call.1} parent=1 // pred_check_branch
      %284 = sbr.rel (0) target = $region45
    $region44: #{tpu_custom_call.1} parent=1 // pred_region
      %s286 = ssub.s32 256, 256
      %287 = vsyncadd [#allocation4], %s286
      %s288 = sshll.u32 [#allocation12], 4
      %s289 = int_to_ptr.vmem [resolvable:$true] %s288
      %294 = dma.vmem_to_hbm [thread:$0]  %s289, 256, %s5, [#allocation4], 128, 128, 8
    $region45: #{tpu_custom_call.1} parent=1 // pred_fallthru
      _
    // Predicated region
    $region46: #{tpu_custom_call.1} parent=1 // pred_check
      _
    $region47: #{tpu_custom_call.1} parent=1 // pred_check_branch
      %296 = sbr.rel (0) target = $region49
    $region48: #{tpu_custom_call.1} parent=1 // pred_region
      %297 = dma.done [#allocation4], 256
    $region49: #{tpu_custom_call.1} parent=1 // pred_fallthru
      _
    %298 = vsyncpa [#allocation3], 1
    %299 = vsyncpa [#allocation4], 1
    %300 = vsyncpa [#allocation5], 1
    %301 = vsyncpa [#allocation6], 1
    %302 = vsyncpa [#allocation9], 1

</llo_original>
